<compile_context>
chip_gen: v5e
topology: v5e:2x2
jax: 0.10.0
libtpu: 0.0.40
codegen_flags: <defaults>
</compile_context>

<pallas_src>
import functools

import jax
import jax.numpy as jnp
import numpy as np
from jax.experimental import pallas as pl
from jax.experimental.pallas import tpu as pltpu


# ----------------------------- Pallas kernel ------------------------------ #
def _piecewise_xor_kernel(x_ref, w_ref, o_ref, *, n_pieces, out_dim):
    # x: (B, I); w: (I, P*F) with column index = p*F + f.
    # One wide MXU matmul, f32 accumulate.
    scores = jnp.dot(
        x_ref[...], w_ref[...], preferred_element_type=jnp.float32
    )  # (B, P*F)

    # Max over pieces: running maximum across the P contiguous F-wide column
    # groups (static lane slices, fully unrolled -> plain VPU maximums).
    acc = scores[:, 0:out_dim]
    for p in range(1, n_pieces):
        acc = jnp.maximum(acc, scores[:, p * out_dim:(p + 1) * out_dim])

    # act = Identity in this configuration.
    o_ref[...] = acc.astype(o_ref.dtype)


def piecewise_xor_forward(x, w_kernel, n_pieces, out_dim):
    """x: (B, I) f32; w_kernel: (I, P*F) f32 (col = p*F + f) -> (B, out_dim)."""
    B, I = x.shape
    PF = w_kernel.shape[1]
    assert PF == n_pieces * out_dim

    cost = pl.CostEstimate(
        flops=2 * B * I * PF,
        transcendentals=0,
        bytes_accessed=4 * (B * I + I * PF + B * out_dim),
    )

    kernel = functools.partial(
        _piecewise_xor_kernel, n_pieces=n_pieces, out_dim=out_dim
    )

    return pl.pallas_call(
        kernel,
        out_shape=jax.ShapeDtypeStruct((B, out_dim), x.dtype),
        in_specs=[
            pl.BlockSpec(memory_space=pltpu.MemorySpace.VMEM),
            pl.BlockSpec(memory_space=pltpu.MemorySpace.VMEM),
        ],
        out_specs=pl.BlockSpec(memory_space=pltpu.MemorySpace.VMEM),
        cost_estimate=cost,
    )(x, w_kernel)


# ------------------------- parameter construction ------------------------- #
def init_features(inp_dim, out_dim):
    """Deterministic init, exactly mirroring PiecewiseXorLayer.init_weights."""
    feature_dim = inp_dim
    f = np.zeros((out_dim, feature_dim), dtype=np.float32)
    step = feature_dim // out_dim
    for i, j in enumerate(range(0, feature_dim, step)):
        f[i, j] = 1.0
    f = f / 2.0 - 0.1
    return jnp.asarray(f)


def _piece_scale_shift(n_pieces, dtype):
    p_idx = jnp.arange(n_pieces, dtype=dtype)
    scale = 1.0 + 0.25 * p_idx   # (P,)
    shift = 0.01 * p_idx         # (P,)
    return scale, shift


def sampler_kernel_layout(features, n_pieces):
    """Deterministic synthetic sampler, emitted directly in kernel layout.

    Produces w[i, p*F + f] == features[f, i] * scale[p] + shift[p], i.e. the
    same weights as the (F, P, I) sampler but laid out as (I, P*F) so the
    kernel needs no transpose and can do a single x @ w matmul.
    The real module takes an arbitrary user-supplied sampler; this broadcast
    construction exercises the same forward hot path.
    """
    F_dim, I = features.shape
    scale, shift = _piece_scale_shift(n_pieces, features.dtype)
    w3 = features.T[:, None, :] * scale[None, :, None] + shift[None, :, None]
    return w3.reshape(I, n_pieces * F_dim)            # (I, P*F)


def sampler_ref_layout(features, n_pieces):
    """Same sampler in the module's native (F, P, I) layout (reference only)."""
    scale, shift = _piece_scale_shift(n_pieces, features.dtype)
    return features[:, None, :] * scale[None, :, None] + shift[None, :, None]


# ---------------------------------- main ----------------------------------- #
if __name__ == "__main__":
    B, inp_dim, out_dim, n_pieces = 8, 32, 4, 5

    key = jax.random.PRNGKey(0)
    x = jax.random.normal(key, (B, inp_dim), dtype=jnp.float32)

    features = init_features(inp_dim, out_dim)              # (out_dim, inp_dim)
    w_kernel = sampler_kernel_layout(features, n_pieces)    # (inp_dim, P*out_dim)

    out = piecewise_xor_forward(x, w_kernel, n_pieces, out_dim)
    out = jax.block_until_ready(out)

    # pure-JAX reference: einsum('b i, f p i -> b p f') then max over p
    ww_ref = sampler_ref_layout(features, n_pieces)          # (out_dim, P, inp_dim)
    scores_ref = jnp.einsum("bi,fpi->bpf", x, ww_ref)
    ref = jnp.max(scores_ref, axis=1)
    np.testing.assert_allclose(np.asarray(out), np.asarray(ref),
                               rtol=1e-5, atol=1e-5)

    print("KERNEL_OK")
</pallas_src>

<mosaic_0001>
module attributes {stable_mosaic.version = 11 : i64} {
  func.func @_piecewise_xor_kernel(%arg0: memref<8x32xf32, #tpu.memory_space<vmem>>, %arg1: memref<32x20xf32, #tpu.memory_space<vmem>>, %arg2: memref<8x4xf32, #tpu.memory_space<vmem>>) attributes {dimension_semantics = [], scalar_prefetch = 0 : i64, scratch_operands = 0 : i64, tpu.core_type = #tpu.core_type<tc>} {
    %c0 = arith.constant 0 : index
    %c0_0 = arith.constant 0 : index
    %0 = vector.load %arg0[%c0, %c0_0] : memref<8x32xf32, #tpu.memory_space<vmem>>, vector<8x32xf32>
    %c0_1 = arith.constant 0 : index
    %c0_2 = arith.constant 0 : index
    %1 = vector.load %arg1[%c0_1, %c0_2] : memref<32x20xf32, #tpu.memory_space<vmem>>, vector<32x20xf32>
    %cst = arith.constant dense<0.000000e+00> : vector<8x20xf32>
    %2 = tpu.matmul %0, %1, %cst {dimension_numbers = #tpu.dot_dimension_numbers<[1], [0], [0], [1], [0, 0, 1, 1], [], []>} : vector<8x32xf32>, vector<32x20xf32>, vector<8x20xf32> -> vector<8x20xf32>
    %3 = vector.extract_strided_slice %2 {offsets = [0, 0], sizes = [8, 4], strides = [1, 1]} : vector<8x20xf32> to vector<8x4xf32>
    %4 = vector.extract_strided_slice %2 {offsets = [0, 4], sizes = [8, 4], strides = [1, 1]} : vector<8x20xf32> to vector<8x4xf32>
    %5 = arith.maximumf %3, %4 : vector<8x4xf32>
    %6 = vector.extract_strided_slice %2 {offsets = [0, 8], sizes = [8, 4], strides = [1, 1]} : vector<8x20xf32> to vector<8x4xf32>
    %7 = arith.maximumf %5, %6 : vector<8x4xf32>
    %8 = vector.extract_strided_slice %2 {offsets = [0, 12], sizes = [8, 4], strides = [1, 1]} : vector<8x20xf32> to vector<8x4xf32>
    %9 = arith.maximumf %7, %8 : vector<8x4xf32>
    %10 = vector.extract_strided_slice %2 {offsets = [0, 16], sizes = [8, 4], strides = [1, 1]} : vector<8x20xf32> to vector<8x4xf32>
    %11 = arith.maximumf %9, %10 : vector<8x4xf32>
    %c0_3 = arith.constant 0 : index
    %c0_4 = arith.constant 0 : index
    %12 = vector.load %arg2[%c0_3, %c0_4] : memref<8x4xf32, #tpu.memory_space<vmem>>, vector<8x4xf32>
    tpu.vector_store %arg2[%c0_3, %c0_4], %11 {strides = array<i32>} : memref<8x4xf32, #tpu.memory_space<vmem>>, vector<8x4xf32>,
    return
  }
}

</mosaic_0001>

<llo_original>
// kernel: tpu_custom_call.1
$region0: #{tpu_custom_call.1}
  #allocation0 [shape = 'u32[]', space=smem, size = 0x4, offset = 0x4, fixed_abs, tag = 'smem constant byte address 0x4 - core index']
  #allocation1 [shape = 'u32[72,128]{1,0:T(1,128)}', space=vmem, size = 0x9000, scoped, tag = 'internal scratch']
  %s0 = inlined_call_operand.vmem [shape: f32[8,32], index: 0, kind: input, shape index: {}]
  %s1 = inlined_call_operand.vmem [shape: f32[32,20], index: 1, kind: input, shape index: {}]
  %s2 = inlined_call_operand.vmem [shape: f32[8,4], index: 2, kind: output, shape index: {}]
  %s3 = sld [smem:[#allocation0]]
  $region18: #{tpu_custom_call.1} parent=0
    _
  %s5 = ssub.s32 1, %s3
  %s6 = scalar_select 0, %s5, %s3
  // Predicated region
  $region2: #{tpu_custom_call.1} parent=0 // pred_check
    _
  $region3: #{tpu_custom_call.1} parent=0 // pred_check_branch
    %8 = sbr.rel (0) target = $region5
  $region4: #{tpu_custom_call.1} parent=0 // pred_region
    _
  $region5: #{tpu_custom_call.1} parent=0 // pred_fallthru
    _
  // Predicated region
  $region6: #{tpu_custom_call.1} parent=0 // pred_check
    _
  $region7: #{tpu_custom_call.1} parent=0 // pred_check_branch
    %10 = sbr.rel (0) target = $region9
  $region8: #{tpu_custom_call.1} parent=0 // pred_region
    _
  $region9: #{tpu_custom_call.1} parent=0 // pred_fallthru
    _
  %v11 = vld [vmem:[%s0] sm:$0xff]
  %v12 = vld [vmem:[%s1] sm:$0xff]
  %v13 = vld [vmem:[%s1 + $0x8] sm:$0xff]
  %v14 = vld [vmem:[%s1 + $0x10] sm:$0xff]
  %v15 = vld [vmem:[%s1 + $0x18] sm:$0xff]
  %vm16 = vcmask 261120
  %v18 = vsel %vm16, %v11, 0
  %20 = vmatpush.msra.mxu0 0.0
  %21 = vmatpush.msra.mxu0 0.0
  %22 = vmatpush.msra.mxu0 0.0
  %23 = vmatpush.msra.mxu0 0.0
  %24 = vmatpush.msra.mxu0 0.0
  %25 = vmatpush.msra.mxu0 0.0
  %26 = vmatpush.msra.mxu0 0.0
  %27 = vmatpush.msra.mxu0 0.0
  %28 = vmatpush.msra.mxu0 0.0
  %29 = vmatpush.msra.mxu0 0.0
  %30 = vmatpush.msra.mxu0 0.0
  %31 = vmatpush.msra.mxu0 0.0
  %32 = vmatpush.msra.mxu0 %v15
  %33 = vmatpush.msra.mxu0 %v14
  %34 = vmatpush.msra.mxu0 %v13
  %35 = vmatpush.msra.mxu0 %v12
  %36 = vmatmul.f32.gmra.mxu0 %v18
  %v37 = vpop.f32.mrf.mxu0
  %v38 = vadd.f32 0.0, %v37
  %39 = vdwg.mxu0
  %41 = vrot.lane.b32.xlu0 %v38, 124
  %v42 = vpop.permute.xlu0 %41
  %v44 = vmax.f32 %v38, %v42
  %45 = vrot.lane.b32.xlu0 %v38, 120
  %v46 = vpop.permute.xlu0 %45
  %v48 = vmax.f32 %v44, %v46
  %49 = vrot.lane.b32.xlu0 %v38, 116
  %v50 = vpop.permute.xlu0 %49
  %v52 = vmax.f32 %v48, %v50
  %53 = vrot.lane.b32.xlu0 %v38, 112
  %v54 = vpop.permute.xlu0 %53
  %v56 = vmax.f32 %v52, %v54
  %vm57 = vcmask 31744
  %58 = vst.msk [vmem:[%s2] sm:$0xff] %vm57, %v56
  // Predicated region
  $region10: #{tpu_custom_call.1} parent=0 // pred_check
    _
  $region11: #{tpu_custom_call.1} parent=0 // pred_check_branch
    %60 = sbr.rel (0) target = $region13
  $region12: #{tpu_custom_call.1} parent=0 // pred_region
    _
  $region13: #{tpu_custom_call.1} parent=0 // pred_fallthru
    _
  // Predicated region
  $region14: #{tpu_custom_call.1} parent=0 // pred_check
    _
  $region15: #{tpu_custom_call.1} parent=0 // pred_check_branch
    %62 = sbr.rel (0) target = $region17
  $region16: #{tpu_custom_call.1} parent=0 // pred_region
    _
  $region17: #{tpu_custom_call.1} parent=0 // pred_fallthru
    _

</llo_original>
